<compile_context>
chip_gen: v7x
topology: tpu7x:2x2x1
jax: 0.10.0
libtpu: 0.0.40
codegen_flags: <defaults>
</compile_context>

<pallas_src>
import functools
import math

import jax
import jax.numpy as jnp
from jax.experimental import pallas as pl
from jax.experimental.pallas import tpu as pltpu

_LANE = 128   # last-dim (lane) alignment


def _round_up(x, m):
    return ((x + m - 1) // m) * m


def _vmem_budget_bytes():
    """Per-generation usable VMEM (capacity minus headroom)."""
    try:
        cap = int(pltpu.get_tpu_info().vmem_capacity_bytes)
    except Exception:
        cap = 64 * 1024 * 1024          # conservative default (v7x per-core)
    headroom = max(cap // 8, 8 * 1024 * 1024)
    return max(cap - headroom, 16 * 1024 * 1024)


def _pick_tm(batch, sublane_mult):
    """Batch-tile size: low padding waste, >=2 tiles when possible, big tiles."""
    batch = max(int(batch), 1)
    if batch <= 2 * sublane_mult:
        # Tiny batch: one sublane-packed tile; splitting would be pure padding.
        return _round_up(batch, sublane_mult)
    candidates = sorted(
        {c for c in (512, 256, 128, 64, 32, 16) if c % sublane_mult == 0},
        reverse=True)
    best_tm, best_key = candidates[-1], None
    max_waste = max(batch // 4, sublane_mult)
    for tm in candidates:
        m_pad = _round_up(batch, tm)
        waste = m_pad - batch
        if waste > max_waste:
            continue
        n_tiles = m_pad // tm
        # Prefer >=2 tiles (v7x megacore), then larger tiles, then less waste.
        key = (0 if n_tiles >= 2 else 1, -tm, waste)
        if best_key is None or key < best_key:
            best_key, best_tm = key, tm
    return best_tm


def _make_mlp_kernel(num_layers):
    """relu(... relu(x @ W1 + b1) ... @ Wn + bn) computed in one pass."""

    def kernel(x_ref, *refs):
        o_ref = refs[-1]
        y = x_ref[...]                               # (tm, d0_pad) compute dtype
        for i in range(num_layers):
            w = refs[2 * i][...]                     # (din_pad, dout_pad)
            b = refs[2 * i + 1][...]                 # (1, dout_pad) f32
            acc = jnp.dot(y, w, preferred_element_type=jnp.float32)
            if i + 1 < num_layers:
                # Narrow-dtype epilogue: one f32->bf16 cast, then bias + ReLU
                # in bf16 (half the VPU work on v6e/v7x; thin layers are
                # VALU-bound).  Padded columns stay exactly zero.
                a = acc.astype(w.dtype)
                y = jnp.maximum(a + b.astype(w.dtype), 0.0)
            else:
                # Final layer: f32 epilogue, f32 output.
                y = jnp.maximum(acc + b, 0.0)
        o_ref[...] = y.astype(o_ref.dtype)

    return kernel


def _fused_mlp_forward(x, weights, biases, *, out_dim, compute_dtype,
                       vmem_budget):
    """Pads (only where needed), runs the fused stack, crops (only if padded)."""
    batch, d_in = x.shape
    num_layers = len(weights)
    d_in_pad = weights[0].shape[0]
    d_out_pad = weights[-1].shape[1]

    cbytes = jnp.dtype(compute_dtype).itemsize
    sublane_mult = (8 * 4) // cbytes            # rows per vreg: 8 f32 / 16 bf16
    tm = _pick_tm(batch, sublane_mult)
    m_pad = _round_up(batch, tm)

    xc = x.astype(compute_dtype)
    if m_pad != batch or d_in_pad != d_in:
        xc = jnp.pad(xc, ((0, m_pad - batch), (0, d_in_pad - d_in)))

    resident = pl.Buffered(1)                   # params stay put: no double-buffer
    in_specs = [pl.BlockSpec((tm, d_in_pad), lambda i: (i, 0))]
    for w, b in zip(weights, biases):
        in_specs.append(pl.BlockSpec(w.shape, lambda i: (0, 0),
                                     pipeline_mode=resident))
        in_specs.append(pl.BlockSpec(b.shape, lambda i: (0, 0),
                                     pipeline_mode=resident))

    # VMEM need: double-buffered x/out tiles + single-buffered params + f32
    # activation temps for the widest layer; 1.5x + 4 MiB slack for compiler
    # scratch, clamped to the per-generation budget.
    widest = max([d_in_pad] + [w.shape[1] for w in weights])
    need = 2 * tm * d_in_pad * cbytes + 2 * tm * d_out_pad * 4
    need += sum(w.size * cbytes + b.size * 4 for w, b in zip(weights, biases))
    need += 2 * tm * widest * 4
    vmem_limit = int(min(max(need * 3 // 2 + (4 << 20), 16 << 20), vmem_budget))

    grid_spec = pltpu.PrefetchScalarGridSpec(
        num_scalar_prefetch=0,
        grid=(m_pad // tm,),
        in_specs=in_specs,
        out_specs=pl.BlockSpec((tm, d_out_pad), lambda i: (i, 0)),
    )

    out_p = pl.pallas_call(
        _make_mlp_kernel(num_layers),
        out_shape=jax.ShapeDtypeStruct((m_pad, d_out_pad), jnp.float32),
        grid_spec=grid_spec,
        compiler_params=pltpu.CompilerParams(
            dimension_semantics=("parallel",),
            vmem_limit_bytes=vmem_limit),
    )(xc, *[a for wb in zip(weights, biases) for a in wb])

    if m_pad == batch and d_out_pad == out_dim:
        return out_p
    return out_p[:batch, :out_dim]


def xavier_uniform(key, fan_in, fan_out, dtype=jnp.float32):
    # Matches torch.nn.init.xavier_uniform_ (gain=1); torch stores (out, in).
    bound = math.sqrt(6.0 / (fan_in + fan_out))
    w_t = jax.random.uniform(key, (fan_out, fan_in), dtype,
                             minval=-bound, maxval=bound)
    return w_t.T  # (in, out) layout for y = x @ W


def linear_bias_default(key, fan_in, fan_out, dtype=jnp.float32):
    # torch nn.Linear default bias init: U(-1/sqrt(fan_in), 1/sqrt(fan_in)).
    bound = 1.0 / math.sqrt(fan_in)
    return jax.random.uniform(key, (1, fan_out), dtype,
                              minval=-bound, maxval=bound)


class MLP:
    """JAX/Pallas equivalent of the PyTorch MLP (Linear -> ReLU stack).

    dropout=None and batch_norm=None (the torch defaults) -> the forward pass
    is a stack of Linear -> ReLU layers, fused into one Pallas kernel.  MXU
    inputs are bf16 with f32 accumulation (documented deviation from full-f32
    torch math).
    """

    def __init__(self, fc_in_dim, fc_dims, key, compute_dtype=jnp.bfloat16):
        layer_dims = [fc_in_dim] + list(fc_dims)
        self.fc_dims = list(fc_dims)
        self.compute_dtype = compute_dtype

        self.weights = []       # unpadded f32 (in, out) — reference numerics
        self.biases = []        # unpadded f32 (1, out)
        self.weights_pad = []   # lane-dense padded, compute_dtype
        self.biases_pad = []    # lane-dense padded, f32
        for i in range(len(layer_dims) - 1):
            key, wk, bk = jax.random.split(key, 3)
            din, dout = layer_dims[i], layer_dims[i + 1]
            w = xavier_uniform(wk, din, dout)
            b = linear_bias_default(bk, din, dout)
            self.weights.append(w)
            self.biases.append(b)

            din_p, dout_p = _round_up(din, _LANE), _round_up(dout, _LANE)
            w_p = jnp.zeros((din_p, dout_p), compute_dtype)
            w_p = w_p.at[:din, :dout].set(w.astype(compute_dtype))
            b_p = jnp.zeros((1, dout_p), jnp.float32).at[:, :dout].set(b)
            self.weights_pad.append(w_p)
            self.biases_pad.append(b_p)

        self._forward = jax.jit(functools.partial(
            _fused_mlp_forward,
            out_dim=self.fc_dims[-1],
            compute_dtype=compute_dtype,
            vmem_budget=_vmem_budget_bytes()))

    def __call__(self, feature):
        return self._forward(feature,
                             tuple(self.weights_pad),
                             tuple(self.biases_pad))


if __name__ == "__main__":
    key = jax.random.PRNGKey(0)
    key, xkey, pkey = jax.random.split(key, 3)

    batch = 8
    fc_in_dim = 32
    fc_dims = [64, 32, 16]

    x = jax.random.normal(xkey, (batch, fc_in_dim), dtype=jnp.float32)

    model = MLP(fc_in_dim, fc_dims, pkey)
    out = jax.block_until_ready(model(x))
    assert out.shape == (batch, fc_dims[-1]), out.shape

    # Reference 1: plain JAX mirroring the kernel's compute path (bf16 MXU
    # inputs, f32 accumulation, bf16 epilogue on intermediate layers).
    n = len(model.weights)
    ref = x.astype(model.compute_dtype)
    for i, (w, b) in enumerate(zip(model.weights, model.biases)):
        acc = jnp.dot(ref, w.astype(model.compute_dtype),
                      preferred_element_type=jnp.float32)
        if i + 1 < n:
            a = acc.astype(model.compute_dtype)
            ref = jnp.maximum(a + b.astype(model.compute_dtype), 0.0)
        else:
            ref = jnp.maximum(acc + b, 0.0)
    assert jnp.allclose(out, ref, atol=1e-2, rtol=1e-2), \
        float(jnp.max(jnp.abs(out - ref.astype(jnp.float32))))

    # Reference 2: full-f32 math (PyTorch semantics) — loose sanity check on
    # the bf16 compute path.
    ref32 = x
    for w, b in zip(model.weights, model.biases):
        ref32 = jnp.maximum(ref32 @ w + b, 0.0)
    assert jnp.allclose(out, ref32, atol=1e-1, rtol=1e-1), \
        float(jnp.max(jnp.abs(out - ref32)))

    print("KERNEL_OK")
</pallas_src>

<mosaic_0001>
module attributes {stable_mosaic.version = 11 : i64} {
  func.func @kernel(%arg0: i32, %arg1: memref<16x128xbf16, #tpu.memory_space<vmem>>, %arg2: memref<128x128xbf16, #tpu.memory_space<vmem>>, %arg3: memref<1x128xf32, #tpu.memory_space<vmem>>, %arg4: memref<128x128xbf16, #tpu.memory_space<vmem>>, %arg5: memref<1x128xf32, #tpu.memory_space<vmem>>, %arg6: memref<128x128xbf16, #tpu.memory_space<vmem>>, %arg7: memref<1x128xf32, #tpu.memory_space<vmem>>, %arg8: memref<16x128xf32, #tpu.memory_space<vmem>>) attributes {dimension_semantics = [#tpu.dimension_semantics<parallel>], iteration_bounds = array<i64: 1>, scalar_prefetch = 0 : i64, scratch_operands = 0 : i64, tpu.core_type = #tpu.core_type<tc>, window_params = [{transform_indices = @transform_0, window_bounds = array<i64: 16, 128>}, {pipeline_mode = #tpu.pipeline_mode<synchronous>, transform_indices = @transform_1, window_bounds = array<i64: 128, 128>}, {pipeline_mode = #tpu.pipeline_mode<synchronous>, transform_indices = @transform_2, window_bounds = array<i64: 1, 128>}, {pipeline_mode = #tpu.pipeline_mode<synchronous>, transform_indices = @transform_3, window_bounds = array<i64: 128, 128>}, {pipeline_mode = #tpu.pipeline_mode<synchronous>, transform_indices = @transform_4, window_bounds = array<i64: 1, 128>}, {pipeline_mode = #tpu.pipeline_mode<synchronous>, transform_indices = @transform_5, window_bounds = array<i64: 128, 128>}, {pipeline_mode = #tpu.pipeline_mode<synchronous>, transform_indices = @transform_6, window_bounds = array<i64: 1, 128>}, {transform_indices = @transform_7, window_bounds = array<i64: 16, 128>}]} {
    %c0 = arith.constant 0 : index
    %c0_0 = arith.constant 0 : index
    %0 = vector.load %arg1[%c0, %c0_0] : memref<16x128xbf16, #tpu.memory_space<vmem>>, vector<16x128xbf16>
    %c0_1 = arith.constant 0 : index
    %c0_2 = arith.constant 0 : index
    %1 = vector.load %arg2[%c0_1, %c0_2] : memref<128x128xbf16, #tpu.memory_space<vmem>>, vector<128x128xbf16>
    %c0_3 = arith.constant 0 : index
    %c0_4 = arith.constant 0 : index
    %2 = vector.load %arg3[%c0_3, %c0_4] : memref<1x128xf32, #tpu.memory_space<vmem>>, vector<1x128xf32>
    %cst = arith.constant dense<0.000000e+00> : vector<16x128xf32>
    %3 = tpu.matmul %0, %1, %cst {dimension_numbers = #tpu.dot_dimension_numbers<[1], [0], [0], [1], [0, 0, 1, 1], [], []>} : vector<16x128xbf16>, vector<128x128xbf16>, vector<16x128xf32> -> vector<16x128xf32>
    %4 = arith.truncf %3 : vector<16x128xf32> to vector<16x128xbf16>
    %5 = arith.truncf %2 : vector<1x128xf32> to vector<1x128xbf16>
    %6 = vector.broadcast %5 : vector<1x128xbf16> to vector<16x128xbf16>
    %7 = arith.addf %4, %6 : vector<16x128xbf16>
    %cst_5 = arith.constant 0.000000e+00 : bf16
    %8 = vector.broadcast %cst_5 : bf16 to vector<16x128xbf16>
    %9 = arith.maximumf %7, %8 : vector<16x128xbf16>
    %c0_6 = arith.constant 0 : index
    %c0_7 = arith.constant 0 : index
    %10 = vector.load %arg4[%c0_6, %c0_7] : memref<128x128xbf16, #tpu.memory_space<vmem>>, vector<128x128xbf16>
    %c0_8 = arith.constant 0 : index
    %c0_9 = arith.constant 0 : index
    %11 = vector.load %arg5[%c0_8, %c0_9] : memref<1x128xf32, #tpu.memory_space<vmem>>, vector<1x128xf32>
    %cst_10 = arith.constant dense<0.000000e+00> : vector<16x128xf32>
    %12 = tpu.matmul %9, %10, %cst_10 {dimension_numbers = #tpu.dot_dimension_numbers<[1], [0], [0], [1], [0, 0, 1, 1], [], []>} : vector<16x128xbf16>, vector<128x128xbf16>, vector<16x128xf32> -> vector<16x128xf32>
    %13 = arith.truncf %12 : vector<16x128xf32> to vector<16x128xbf16>
    %14 = arith.truncf %11 : vector<1x128xf32> to vector<1x128xbf16>
    %15 = vector.broadcast %14 : vector<1x128xbf16> to vector<16x128xbf16>
    %16 = arith.addf %13, %15 : vector<16x128xbf16>
    %cst_11 = arith.constant 0.000000e+00 : bf16
    %17 = vector.broadcast %cst_11 : bf16 to vector<16x128xbf16>
    %18 = arith.maximumf %16, %17 : vector<16x128xbf16>
    %c0_12 = arith.constant 0 : index
    %c0_13 = arith.constant 0 : index
    %19 = vector.load %arg6[%c0_12, %c0_13] : memref<128x128xbf16, #tpu.memory_space<vmem>>, vector<128x128xbf16>
    %c0_14 = arith.constant 0 : index
    %c0_15 = arith.constant 0 : index
    %20 = vector.load %arg7[%c0_14, %c0_15] : memref<1x128xf32, #tpu.memory_space<vmem>>, vector<1x128xf32>
    %cst_16 = arith.constant dense<0.000000e+00> : vector<16x128xf32>
    %21 = tpu.matmul %18, %19, %cst_16 {dimension_numbers = #tpu.dot_dimension_numbers<[1], [0], [0], [1], [0, 0, 1, 1], [], []>} : vector<16x128xbf16>, vector<128x128xbf16>, vector<16x128xf32> -> vector<16x128xf32>
    %22 = vector.broadcast %20 : vector<1x128xf32> to vector<16x128xf32>
    %23 = arith.addf %21, %22 : vector<16x128xf32>
    %cst_17 = arith.constant 0.000000e+00 : f32
    %24 = vector.broadcast %cst_17 : f32 to vector<16x128xf32>
    %25 = arith.maximumf %23, %24 : vector<16x128xf32>
    %c0_18 = arith.constant 0 : index
    %c0_19 = arith.constant 0 : index
    %26 = vector.load %arg8[%c0_18, %c0_19] : memref<16x128xf32, #tpu.memory_space<vmem>>, vector<16x128xf32>
    tpu.vector_store %arg8[%c0_18, %c0_19], %25 {strides = array<i32>} : memref<16x128xf32, #tpu.memory_space<vmem>>, vector<16x128xf32>,
    return
  }
  func.func @transform_0(%arg0: i32) -> (i32, i32) {
    %c0_i32 = arith.constant 0 : i32
    %c0_i32_0 = arith.constant 0 : i32
    return %arg0, %c0_i32 : i32, i32
  }
  func.func @transform_1(%arg0: i32) -> (i32, i32) {
    %c0_i32 = arith.constant 0 : i32
    %c0_i32_0 = arith.constant 0 : i32
    %c0_i32_1 = arith.constant 0 : i32
    return %c0_i32, %c0_i32_0 : i32, i32
  }
  func.func @transform_2(%arg0: i32) -> (i32, i32) {
    %c0_i32 = arith.constant 0 : i32
    %c0_i32_0 = arith.constant 0 : i32
    %c0_i32_1 = arith.constant 0 : i32
    return %c0_i32, %c0_i32_0 : i32, i32
  }
  func.func @transform_3(%arg0: i32) -> (i32, i32) {
    %c0_i32 = arith.constant 0 : i32
    %c0_i32_0 = arith.constant 0 : i32
    %c0_i32_1 = arith.constant 0 : i32
    return %c0_i32, %c0_i32_0 : i32, i32
  }
  func.func @transform_4(%arg0: i32) -> (i32, i32) {
    %c0_i32 = arith.constant 0 : i32
    %c0_i32_0 = arith.constant 0 : i32
    %c0_i32_1 = arith.constant 0 : i32
    return %c0_i32, %c0_i32_0 : i32, i32
  }
  func.func @transform_5(%arg0: i32) -> (i32, i32) {
    %c0_i32 = arith.constant 0 : i32
    %c0_i32_0 = arith.constant 0 : i32
    %c0_i32_1 = arith.constant 0 : i32
    return %c0_i32, %c0_i32_0 : i32, i32
  }
  func.func @transform_6(%arg0: i32) -> (i32, i32) {
    %c0_i32 = arith.constant 0 : i32
    %c0_i32_0 = arith.constant 0 : i32
    %c0_i32_1 = arith.constant 0 : i32
    return %c0_i32, %c0_i32_0 : i32, i32
  }
  func.func @transform_7(%arg0: i32) -> (i32, i32) {
    %c0_i32 = arith.constant 0 : i32
    %c0_i32_0 = arith.constant 0 : i32
    return %arg0, %c0_i32 : i32, i32
  }
}

</mosaic_0001>

<llo_original>
// kernel: _fused_mlp_forward.1
$region0: #{_fused_mlp_forward.1}
  #allocation0 [shape = 'u32[]', space=smem, size = 0x4, offset = 0x4, fixed_abs, tag = 'smem constant byte address 0x4 - core index']
  #allocation1 [shape = 'u32[144,128]{1,0:T(1,128)}', space=vmem, size = 0x12000, scoped, tag = 'internal scratch']
  %s0 = inlined_call_operand.vmem [shape: bf16[16,128], index: 0, kind: input, shape index: {}]
  %s1 = inlined_call_operand.hbm [shape: bf16[128,128], index: 1, kind: input, shape index: {}]
  %s2 = inlined_call_operand.vmem [shape: f32[1,128], index: 2, kind: input, shape index: {}]
  %s3 = inlined_call_operand.hbm [shape: bf16[128,128], index: 3, kind: input, shape index: {}]
  %s4 = inlined_call_operand.vmem [shape: f32[1,128], index: 4, kind: input, shape index: {}]
  %s5 = inlined_call_operand.hbm [shape: bf16[128,128], index: 5, kind: input, shape index: {}]
  %s6 = inlined_call_operand.vmem [shape: f32[1,128], index: 6, kind: input, shape index: {}]
  %s7 = inlined_call_operand.vmem [shape: f32[16,128], index: 7, kind: output, shape index: {}]
  %s8 = sld [smem:[#allocation0]]
  $region50: #{_fused_mlp_forward.1} parent=0
    _
  %s10 = ssub.s32 1, %s8
  %s11 = scalar_select 0, %s10, %s8
  $region1: #{_fused_mlp_forward.1} parent=0
    #allocation2 [shape = 'u8[32768]{0}', space=vmem, size = 0x8000, scoped, tag = 'input window, operand 1, single buffered']
    #allocation3 [shape = 's32[1]{0}', space=sflag, size = 0x4, scoped, tag = 'scoped memory for _fused_mlp_forward.1']
    #allocation4 [shape = 'u8[32768]{0}', space=vmem, size = 0x8000, scoped, tag = 'input window, operand 3, single buffered']
    #allocation5 [shape = 's32[1]{0}', space=sflag, size = 0x4, scoped, tag = 'scoped memory for _fused_mlp_forward.1']
    #allocation6 [shape = 'u8[32768]{0}', space=vmem, size = 0x8000, scoped, tag = 'input window, operand 5, single buffered']
    %12 = vsyncpa [#allocation3], 0
    %13 = vsyncpa [#allocation5], 0
    // Predicated region
    $region2: #{_fused_mlp_forward.1} parent=1 // pred_check
      _
    $region3: #{_fused_mlp_forward.1} parent=1 // pred_check_branch
      %15 = sbr.rel (0) target = $region5
    $region4: #{_fused_mlp_forward.1} parent=1 // pred_region
      _
    $region5: #{_fused_mlp_forward.1} parent=1 // pred_fallthru
      _
    // Predicated region
    $region6: #{_fused_mlp_forward.1} parent=1 // pred_check
      _
    $region7: #{_fused_mlp_forward.1} parent=1 // pred_check_branch
      %17 = sbr.rel (0) target = $region9
    $region8: #{_fused_mlp_forward.1} parent=1 // pred_region
      %s19 = ssub.s32 1024, 1024
      %20 = vsyncadd [#allocation3], %s19
      %s21 = sshll.u32 [#allocation2], 4
      %s22 = int_to_ptr.vmem [resolvable:$true] %s21
      %27 = dma.hbm_to_vmem [thread:$0]  %s1, 1024, %s22, [#allocation3], 64, 64, 4
    $region9: #{_fused_mlp_forward.1} parent=1 // pred_fallthru
      _
    // Predicated region
    $region10: #{_fused_mlp_forward.1} parent=1 // pred_check
      _
    $region11: #{_fused_mlp_forward.1} parent=1 // pred_check_branch
      %29 = sbr.rel (0) target = $region13
    $region12: #{_fused_mlp_forward.1} parent=1 // pred_region
      _
    $region13: #{_fused_mlp_forward.1} parent=1 // pred_fallthru
      _
    // Predicated region
    $region14: #{_fused_mlp_forward.1} parent=1 // pred_check
      _
    $region15: #{_fused_mlp_forward.1} parent=1 // pred_check_branch
      %31 = sbr.rel (0) target = $region17
    $region16: #{_fused_mlp_forward.1} parent=1 // pred_region
      %s33 = ssub.s32 1024, 1024
      %34 = vsyncadd [#allocation5], %s33
      %s35 = sshll.u32 [#allocation4], 4
      %s36 = int_to_ptr.vmem [resolvable:$true] %s35
      %41 = dma.hbm_to_vmem [thread:$0]  %s3, 1024, %s36, [#allocation5], 64, 64, 4
    $region17: #{_fused_mlp_forward.1} parent=1 // pred_fallthru
      _
    // Predicated region
    $region18: #{_fused_mlp_forward.1} parent=1 // pred_check
      _
    $region19: #{_fused_mlp_forward.1} parent=1 // pred_check_branch
      %43 = sbr.rel (0) target = $region21
    $region20: #{_fused_mlp_forward.1} parent=1 // pred_region
      _
    $region21: #{_fused_mlp_forward.1} parent=1 // pred_fallthru
      _
    // Predicated region
    $region22: #{_fused_mlp_forward.1} parent=1 // pred_check
      _
    $region23: #{_fused_mlp_forward.1} parent=1 // pred_check_branch
      %45 = sbr.rel (0) target = $region25
    $region24: #{_fused_mlp_forward.1} parent=1 // pred_region
      %s47 = ssub.s32 1024, 1024
      %48 = vsyncadd [#allocation5], %s47
      %s49 = sshll.u32 [#allocation6], 4
      %s50 = int_to_ptr.vmem [resolvable:$true] %s49
      %55 = dma.hbm_to_vmem [thread:$0]  %s5, 1024, %s50, [#allocation5], 64, 64, 4
    $region25: #{_fused_mlp_forward.1} parent=1 // pred_fallthru
      _
    // Predicated region
    $region26: #{_fused_mlp_forward.1} parent=1 // pred_check
      _
    $region27: #{_fused_mlp_forward.1} parent=1 // pred_check_branch
      %57 = sbr.rel (0) target = $region29
    $region28: #{_fused_mlp_forward.1} parent=1 // pred_region
      _
    $region29: #{_fused_mlp_forward.1} parent=1 // pred_fallthru
      _
    // Predicated region
    $region30: #{_fused_mlp_forward.1} parent=1 // pred_check
      _
    $region31: #{_fused_mlp_forward.1} parent=1 // pred_check_branch
      %59 = sbr.rel (0) target = $region33
    $region32: #{_fused_mlp_forward.1} parent=1 // pred_region
      %60 = dma.done [#allocation3], 1024
    $region33: #{_fused_mlp_forward.1} parent=1 // pred_fallthru
      _
    // Predicated region
    $region34: #{_fused_mlp_forward.1} parent=1 // pred_check
      _
    $region35: #{_fused_mlp_forward.1} parent=1 // pred_check_branch
      %62 = sbr.rel (0) target = $region37
    $region36: #{_fused_mlp_forward.1} parent=1 // pred_region
      %63 = dma.done [#allocation5], 1024
    $region37: #{_fused_mlp_forward.1} parent=1 // pred_fallthru
      _
    // Predicated region
    $region38: #{_fused_mlp_forward.1} parent=1 // pred_check
      _
    $region39: #{_fused_mlp_forward.1} parent=1 // pred_check_branch
      %65 = sbr.rel (0) target = $region41
    $region40: #{_fused_mlp_forward.1} parent=1 // pred_region
      %66 = dma.done [#allocation5], 1024
    $region41: #{_fused_mlp_forward.1} parent=1 // pred_fallthru
      _
    %v68 = vld [vmem:[%s0] sm:$0xf]
    %v69 = vld [vmem:[%s0 + $0x4] sm:$0xf]
    %v70 = vld [vmem:[#allocation2] sm:$0xf]
    %v71 = vld [vmem:[#allocation2 + $0x4] sm:$0xf]
    %v72 = vld [vmem:[#allocation2 + $0x8] sm:$0xf]
    %v73 = vld [vmem:[#allocation2 + $0xc] sm:$0xf]
    %v74 = vld [vmem:[#allocation2 + $0x10] sm:$0xf]
    %v75 = vld [vmem:[#allocation2 + $0x14] sm:$0xf]
    %v76 = vld [vmem:[#allocation2 + $0x18] sm:$0xf]
    %v77 = vld [vmem:[#allocation2 + $0x1c] sm:$0xf]
    %v78 = vld [vmem:[#allocation2 + $0x20] sm:$0xf]
    %v79 = vld [vmem:[#allocation2 + $0x24] sm:$0xf]
    %v80 = vld [vmem:[#allocation2 + $0x28] sm:$0xf]
    %v81 = vld [vmem:[#allocation2 + $0x2c] sm:$0xf]
    %v82 = vld [vmem:[#allocation2 + $0x30] sm:$0xf]
    %v83 = vld [vmem:[#allocation2 + $0x34] sm:$0xf]
    %v84 = vld [vmem:[#allocation2 + $0x38] sm:$0xf]
    %v85 = vld [vmem:[#allocation2 + $0x3c] sm:$0xf]
    %v86 = vld [vmem:[%s2] sm:$0x1]
    %v89 = vunpack.c.l.b16 %v68
    %v90 = vunpack.c.l.b16 %v69
    %v91 = vpack.c.b16 %v90, %v89
    %v109 = vunpack.c.l.b16 %v70
    %v110 = vunpack.c.l.b16 %v71
    %v111 = vunpack.c.l.b16 %v72
    %v112 = vunpack.c.l.b16 %v73
    %v113 = vunpack.c.l.b16 %v74
    %v114 = vunpack.c.l.b16 %v75
    %v115 = vunpack.c.l.b16 %v76
    %v116 = vunpack.c.l.b16 %v77
    %v117 = vunpack.c.l.b16 %v78
    %v118 = vunpack.c.l.b16 %v79
    %v119 = vunpack.c.l.b16 %v80
    %v120 = vunpack.c.l.b16 %v81
    %v121 = vunpack.c.l.b16 %v82
    %v122 = vunpack.c.l.b16 %v83
    %v123 = vunpack.c.l.b16 %v84
    %v124 = vunpack.c.l.b16 %v85
    %v125 = vpack.c.b16 %v110, %v109
    %v126 = vpack.c.b16 %v112, %v111
    %v127 = vpack.c.b16 %v114, %v113
    %v128 = vpack.c.b16 %v116, %v115
    %v129 = vpack.c.b16 %v118, %v117
    %v130 = vpack.c.b16 %v120, %v119
    %v131 = vpack.c.b16 %v122, %v121
    %v132 = vpack.c.b16 %v124, %v123
    %141 = vmatprep.subr.bf16.mxu0 0
    %142 = vmatpush1.bf16.msra.mxu0 %v125
    %143 = vmatprep.subr.bf16.mxu0 0
    %144 = vmatpush1.bf16.msra.mxu0 %v126
    %145 = vmatprep.subr.bf16.mxu0 0
    %146 = vmatpush1.bf16.msra.mxu0 %v127
    %147 = vmatprep.subr.bf16.mxu0 0
    %148 = vmatpush1.bf16.msra.mxu0 %v128
    %149 = vmatprep.subr.bf16.mxu0 0
    %150 = vmatpush1.bf16.msra.mxu0 %v129
    %151 = vmatprep.subr.bf16.mxu0 0
    %152 = vmatpush1.bf16.msra.mxu0 %v130
    %153 = vmatprep.subr.bf16.mxu0 0
    %154 = vmatpush1.bf16.msra.mxu0 %v131
    %155 = vmatprep.subr.bf16.mxu0 0
    %156 = vmatpush1.bf16.msra.mxu0 %v132
    %157 = vmatprep.subr.bf16.mxu0 0
    %158 = vmatpush1.bf16.msra.mxu0 0
    %159 = vmatprep.subr.bf16.mxu0 0
    %160 = vmatpush1.bf16.msra.mxu0 0
    %161 = vmatprep.subr.bf16.mxu0 0
    %162 = vmatpush1.bf16.msra.mxu0 0
    %163 = vmatprep.subr.bf16.mxu0 0
    %164 = vmatpush1.bf16.msra.mxu0 0
    %165 = vmatprep.subr.bf16.mxu0 0
    %166 = vmatpush1.bf16.msra.mxu0 0
    %167 = vmatprep.subr.bf16.mxu0 0
    %168 = vmatpush1.bf16.msra.mxu0 0
    %169 = vmatprep.subr.bf16.mxu0 0
    %170 = vmatpush1.bf16.msra.mxu0 0
    %171 = vmatprep.subr.bf16.mxu0 0
    %172 = vmatpush1.bf16.msra.mxu0 0
    %173 = vmatprep.mubr.bf16.mxu0 0
    %174 = vmatmul.mubr.bf16.gmra.mrb[0].mxu0 %v91
    %v175 = vpop.f32.mrb[0].mxu0
    %v176 = vadd.f32 0.0, %v175
    %v177 = vpop.f32.mrb[0].mxu0
    %v178 = vpop.f32.mrb[0].mxu0
    %v179 = vadd.f32 0.0, %v178
    %v180 = vpop.f32.mrb[0].mxu0
    %181 = vdwg.mxu0
    %v182 = vpack.c.bf16 %v179, %v176
    %v183 = vpack.c.bf16 %v86, %v86
    %v185 = vpack.i.b16 %v183, %v183
    %v187 = vlaneseq
    %v188 = vshrl.u32 %v187, 7
    %v189 = vsub.s32 0, %v188
    %v190 = vrot.slane %v185, %v189
    %v191 = vadd.bf16 %v182, %v190
    %v192 = vmax.bf16 %v191, 0
    %v193 = vld [vmem:[#allocation4] sm:$0xf]
    %v194 = vld [vmem:[#allocation4 + $0x4] sm:$0xf]
    %v195 = vld [vmem:[#allocation4 + $0x8] sm:$0xf]
    %v196 = vld [vmem:[#allocation4 + $0xc] sm:$0xf]
    %v197 = vld [vmem:[#allocation4 + $0x10] sm:$0xf]
    %v198 = vld [vmem:[#allocation4 + $0x14] sm:$0xf]
    %v199 = vld [vmem:[#allocation4 + $0x18] sm:$0xf]
    %v200 = vld [vmem:[#allocation4 + $0x1c] sm:$0xf]
    %v201 = vld [vmem:[#allocation4 + $0x20] sm:$0xf]
    %v202 = vld [vmem:[#allocation4 + $0x24] sm:$0xf]
    %v203 = vld [vmem:[#allocation4 + $0x28] sm:$0xf]
    %v204 = vld [vmem:[#allocation4 + $0x2c] sm:$0xf]
    %v205 = vld [vmem:[#allocation4 + $0x30] sm:$0xf]
    %v206 = vld [vmem:[#allocation4 + $0x34] sm:$0xf]
    %v207 = vld [vmem:[#allocation4 + $0x38] sm:$0xf]
    %v208 = vld [vmem:[#allocation4 + $0x3c] sm:$0xf]
    %v209 = vld [vmem:[%s4] sm:$0x1]
    %v226 = vunpack.c.l.b16 %v193
    %v227 = vunpack.c.l.b16 %v194
    %v228 = vunpack.c.l.b16 %v195
    %v229 = vunpack.c.l.b16 %v196
    %v230 = vunpack.c.l.b16 %v197
    %v231 = vunpack.c.l.b16 %v198
    %v232 = vunpack.c.l.b16 %v199
    %v233 = vunpack.c.l.b16 %v200
    %v234 = vunpack.c.l.b16 %v201
    %v235 = vunpack.c.l.b16 %v202
    %v236 = vunpack.c.l.b16 %v203
    %v237 = vunpack.c.l.b16 %v204
    %v238 = vunpack.c.l.b16 %v205
    %v239 = vunpack.c.l.b16 %v206
    %v240 = vunpack.c.l.b16 %v207
    %v241 = vunpack.c.l.b16 %v208
    %v242 = vpack.c.b16 %v227, %v226
    %v243 = vpack.c.b16 %v229, %v228
    %v244 = vpack.c.b16 %v231, %v230
    %v245 = vpack.c.b16 %v233, %v232
    %v246 = vpack.c.b16 %v235, %v234
    %v247 = vpack.c.b16 %v237, %v236
    %v248 = vpack.c.b16 %v239, %v238
    %v249 = vpack.c.b16 %v241, %v240
    %258 = vmatprep.subr.bf16.mxu0 0
    %259 = vmatpush1.bf16.msra.mxu0 %v242
    %260 = vmatprep.subr.bf16.mxu0 0
    %261 = vmatpush1.bf16.msra.mxu0 %v243
    %262 = vmatprep.subr.bf16.mxu0 0
    %263 = vmatpush1.bf16.msra.mxu0 %v244
    %264 = vmatprep.subr.bf16.mxu0 0
    %265 = vmatpush1.bf16.msra.mxu0 %v245
    %266 = vmatprep.subr.bf16.mxu0 0
    %267 = vmatpush1.bf16.msra.mxu0 %v246
    %268 = vmatprep.subr.bf16.mxu0 0
    %269 = vmatpush1.bf16.msra.mxu0 %v247
    %270 = vmatprep.subr.bf16.mxu0 0
    %271 = vmatpush1.bf16.msra.mxu0 %v248
    %272 = vmatprep.subr.bf16.mxu0 0
    %273 = vmatpush1.bf16.msra.mxu0 %v249
    %274 = vmatprep.subr.bf16.mxu0 0
    %275 = vmatpush1.bf16.msra.mxu0 0
    %276 = vmatprep.subr.bf16.mxu0 0
    %277 = vmatpush1.bf16.msra.mxu0 0
    %278 = vmatprep.subr.bf16.mxu0 0
    %279 = vmatpush1.bf16.msra.mxu0 0
    %280 = vmatprep.subr.bf16.mxu0 0
    %281 = vmatpush1.bf16.msra.mxu0 0
    %282 = vmatprep.subr.bf16.mxu0 0
    %283 = vmatpush1.bf16.msra.mxu0 0
    %284 = vmatprep.subr.bf16.mxu0 0
    %285 = vmatpush1.bf16.msra.mxu0 0
    %286 = vmatprep.subr.bf16.mxu0 0
    %287 = vmatpush1.bf16.msra.mxu0 0
    %288 = vmatprep.subr.bf16.mxu0 0
    %289 = vmatpush1.bf16.msra.mxu0 0
    %290 = vmatprep.mubr.bf16.mxu0 0
    %291 = vmatmul.mubr.bf16.gmra.mrb[0].mxu0 %v192
    %v292 = vpop.f32.mrb[0].mxu0
    %v293 = vadd.f32 0.0, %v292
    %v294 = vpop.f32.mrb[0].mxu0
    %v295 = vpop.f32.mrb[0].mxu0
    %v296 = vadd.f32 0.0, %v295
    %v297 = vpop.f32.mrb[0].mxu0
    %298 = vdwg.mxu0
    %v299 = vpack.c.bf16 %v296, %v293
    %v300 = vpack.c.bf16 %v209, %v209
    %v302 = vpack.i.b16 %v300, %v300
    %v304 = vlaneseq
    %v305 = vshrl.u32 %v304, 7
    %v306 = vsub.s32 0, %v305
    %v307 = vrot.slane %v302, %v306
    %v308 = vadd.bf16 %v299, %v307
    %v309 = vmax.bf16 %v308, 0
    %v310 = vld [vmem:[#allocation6] sm:$0xf]
    %v311 = vld [vmem:[#allocation6 + $0x4] sm:$0xf]
    %v312 = vld [vmem:[#allocation6 + $0x8] sm:$0xf]
    %v313 = vld [vmem:[#allocation6 + $0xc] sm:$0xf]
    %v314 = vld [vmem:[#allocation6 + $0x10] sm:$0xf]
    %v315 = vld [vmem:[#allocation6 + $0x14] sm:$0xf]
    %v316 = vld [vmem:[#allocation6 + $0x18] sm:$0xf]
    %v317 = vld [vmem:[#allocation6 + $0x1c] sm:$0xf]
    %v318 = vld [vmem:[#allocation6 + $0x20] sm:$0xf]
    %v319 = vld [vmem:[#allocation6 + $0x24] sm:$0xf]
    %v320 = vld [vmem:[#allocation6 + $0x28] sm:$0xf]
    %v321 = vld [vmem:[#allocation6 + $0x2c] sm:$0xf]
    %v322 = vld [vmem:[#allocation6 + $0x30] sm:$0xf]
    %v323 = vld [vmem:[#allocation6 + $0x34] sm:$0xf]
    %v324 = vld [vmem:[#allocation6 + $0x38] sm:$0xf]
    %v325 = vld [vmem:[#allocation6 + $0x3c] sm:$0xf]
    %v326 = vld [vmem:[%s6] sm:$0x1]
    %v328 = vlaneseq
    %v329 = vshrl.u32 %v328, 7
    %v330 = vsub.s32 0, %v329
    %v331 = vrot.slane %v326, %v330
    %v349 = vunpack.c.l.b16 %v310
    %v350 = vunpack.c.l.b16 %v311
    %v351 = vunpack.c.l.b16 %v312
    %v352 = vunpack.c.l.b16 %v313
    %v353 = vunpack.c.l.b16 %v314
    %v354 = vunpack.c.l.b16 %v315
    %v355 = vunpack.c.l.b16 %v316
    %v356 = vunpack.c.l.b16 %v317
    %v357 = vunpack.c.l.b16 %v318
    %v358 = vunpack.c.l.b16 %v319
    %v359 = vunpack.c.l.b16 %v320
    %v360 = vunpack.c.l.b16 %v321
    %v361 = vunpack.c.l.b16 %v322
    %v362 = vunpack.c.l.b16 %v323
    %v363 = vunpack.c.l.b16 %v324
    %v364 = vunpack.c.l.b16 %v325
    %v365 = vpack.c.b16 %v350, %v349
    %v366 = vpack.c.b16 %v352, %v351
    %v367 = vpack.c.b16 %v354, %v353
    %v368 = vpack.c.b16 %v356, %v355
    %v369 = vpack.c.b16 %v358, %v357
    %v370 = vpack.c.b16 %v360, %v359
    %v371 = vpack.c.b16 %v362, %v361
    %v372 = vpack.c.b16 %v364, %v363
    %381 = vmatprep.subr.bf16.mxu0 0
    %382 = vmatpush1.bf16.msra.mxu0 %v365
    %383 = vmatprep.subr.bf16.mxu0 0
    %384 = vmatpush1.bf16.msra.mxu0 %v366
    %385 = vmatprep.subr.bf16.mxu0 0
    %386 = vmatpush1.bf16.msra.mxu0 %v367
    %387 = vmatprep.subr.bf16.mxu0 0
    %388 = vmatpush1.bf16.msra.mxu0 %v368
    %389 = vmatprep.subr.bf16.mxu0 0
    %390 = vmatpush1.bf16.msra.mxu0 %v369
    %391 = vmatprep.subr.bf16.mxu0 0
    %392 = vmatpush1.bf16.msra.mxu0 %v370
    %393 = vmatprep.subr.bf16.mxu0 0
    %394 = vmatpush1.bf16.msra.mxu0 %v371
    %395 = vmatprep.subr.bf16.mxu0 0
    %396 = vmatpush1.bf16.msra.mxu0 %v372
    %397 = vmatprep.subr.bf16.mxu0 0
    %398 = vmatpush1.bf16.msra.mxu0 0
    %399 = vmatprep.subr.bf16.mxu0 0
    %400 = vmatpush1.bf16.msra.mxu0 0
    %401 = vmatprep.subr.bf16.mxu0 0
    %402 = vmatpush1.bf16.msra.mxu0 0
    %403 = vmatprep.subr.bf16.mxu0 0
    %404 = vmatpush1.bf16.msra.mxu0 0
    %405 = vmatprep.subr.bf16.mxu0 0
    %406 = vmatpush1.bf16.msra.mxu0 0
    %407 = vmatprep.subr.bf16.mxu0 0
    %408 = vmatpush1.bf16.msra.mxu0 0
    %409 = vmatprep.subr.bf16.mxu0 0
    %410 = vmatpush1.bf16.msra.mxu0 0
    %411 = vmatprep.subr.bf16.mxu0 0
    %412 = vmatpush1.bf16.msra.mxu0 0
    %413 = vmatprep.mubr.bf16.mxu0 0
    %414 = vmatmul.mubr.bf16.gmra.mrb[0].mxu0 %v309
    %v415 = vpop.f32.mrb[0].mxu0
    %v416 = vadd.f32 %v331, %v415
    %v417 = vpop.f32.mrb[0].mxu0
    %v418 = vpop.f32.mrb[0].mxu0
    %v419 = vadd.f32 %v331, %v418
    %v420 = vpop.f32.mrb[0].mxu0
    %421 = vdwg.mxu0
    %v422 = vmax.f32 %v416, 0.0
    %v423 = vmax.f32 %v419, 0.0
    %424 = vst [vmem:[%s7] sm:$0xff] %v422
    %425 = vst [vmem:[%s7 + $0x8] sm:$0xff] %v423
    // Predicated region
    $region42: #{_fused_mlp_forward.1} parent=1 // pred_check
      _
    $region43: #{_fused_mlp_forward.1} parent=1 // pred_check_branch
      %427 = sbr.rel (0) target = $region45
    $region44: #{_fused_mlp_forward.1} parent=1 // pred_region
      _
    $region45: #{_fused_mlp_forward.1} parent=1 // pred_fallthru
      _
    // Predicated region
    $region46: #{_fused_mlp_forward.1} parent=1 // pred_check
      _
    $region47: #{_fused_mlp_forward.1} parent=1 // pred_check_branch
      %429 = sbr.rel (0) target = $region49
    $region48: #{_fused_mlp_forward.1} parent=1 // pred_region
      _
    $region49: #{_fused_mlp_forward.1} parent=1 // pred_fallthru
      _
    %430 = vsyncpa [#allocation3], 1
    %431 = vsyncpa [#allocation5], 1

</llo_original>
